<compile_context>
chip_gen: v5e
topology: v5e:2x2
jax: 0.10.0
libtpu: 0.0.40
codegen_flags: <defaults>
</compile_context>

<pallas_src>
import functools

import numpy as np
import jax
import jax.numpy as jnp
from jax.experimental import pallas as pl
from jax.experimental.pallas import tpu as pltpu


def _round_up(x, m):
    return (x + m - 1) // m * m


# ---------------------------------------------------------------------------
# Fused Pallas kernel: Linear -> [Linear+ReLU] x2 -> fused (mu|log_std) head.
# All refs are VMEM tiles; everything for one M-tile lives in VMEM.
# Weights are bf16 (native MXU input); bias adds / ReLU / outputs are f32.
# ---------------------------------------------------------------------------
def _sac_fused_kernel(obs_ref,
                      w_fc1_ref, b_fc1_ref,      # pi_fc1
                      w_h1_ref, b_h1_ref,        # pi_mlp hidden 1
                      w_h2_ref, b_h2_ref,        # pi_mlp hidden 2
                      w_head_ref, b_head_ref,    # fused (mu | log_std) head
                      head_ref, latent_ref):
    # pi_fc1: plain Linear; latent is also a model output (stored pre-ReLU).
    obs_bf16 = obs_ref[...].astype(jnp.bfloat16)
    latent = (jnp.dot(obs_bf16, w_fc1_ref[...],
                      preferred_element_type=jnp.float32)
              + b_fc1_ref[...])
    latent_ref[...] = latent

    # pi_mlp: ReLU MLP over the latent (prev_action / prev_reward unused).
    h = (jnp.dot(latent.astype(jnp.bfloat16), w_h1_ref[...],
                 preferred_element_type=jnp.float32)
         + b_h1_ref[...])
    h = jnp.maximum(h, 0.0)
    h = (jnp.dot(h.astype(jnp.bfloat16), w_h2_ref[...],
                 preferred_element_type=jnp.float32)
         + b_h2_ref[...])
    h = jnp.maximum(h, 0.0)

    # Single fused output head: columns [0:A) = mu, [A:2A) = log_std,
    # remaining lanes are zero padding (lane-dense 128-wide store).
    head_ref[...] = (jnp.dot(h.astype(jnp.bfloat16), w_head_ref[...],
                             preferred_element_type=jnp.float32)
                     + b_head_ref[...])


# ---------------------------------------------------------------------------
# Wrapper: one pallas_call for the whole SacNoConvModel forward.
# ---------------------------------------------------------------------------
def sac_noconv_forward(observation, prev_action, prev_reward, params,
                       action_size):
    # prev_action / prev_reward are part of the rlpyt agent.model interface
    # but are not used by PiMlpModel (matches the PyTorch reference).
    del prev_action, prev_reward

    B, D = observation.shape
    w_fc1, b_fc1 = params["w_fc1"], params["b_fc1"]
    w_h1, b_h1 = params["w_h1"], params["b_h1"]
    w_h2, b_h2 = params["w_h2"], params["b_h2"]
    w_head, b_head = params["w_head"], params["b_head"]
    L = w_fc1.shape[1]
    H1 = w_h1.shape[1]
    H2 = w_h2.shape[1]
    HP = w_head.shape[1]                      # padded head width (>=128)
    A = action_size

    # Batch tiling: pad rows to 8 sublanes; single step for small batches,
    # >=2 balanced steps (both v7x TCs) capped at 512 rows for large ones.
    B_pad8 = _round_up(B, 8)
    if B_pad8 <= 256:
        bm = B_pad8
    else:
        bm = min(512, _round_up((B_pad8 + 1) // 2, 8))
    B_pad = _round_up(B_pad8, bm)
    obs_p = observation
    if B_pad != B:
        obs_p = jnp.pad(observation, ((0, B_pad - B), (0, 0)))

    grid = (B_pad // bm,)

    def rep(shape):      # whole-array weight/bias, constant block index
        return pl.BlockSpec(shape, lambda i: (0, 0))

    def row(n):          # batch-tiled activation / output
        return pl.BlockSpec((bm, n), lambda i: (i, 0))

    flops = 2 * B_pad * (D * L + L * H1 + H1 * H2 + H2 * HP)
    bytes_accessed = (4 * B_pad * (D + L + HP)                       # f32 act
                      + 2 * (D * L + L * H1 + H1 * H2 + H2 * HP)     # bf16 w
                      + 4 * (L + H1 + H2 + HP))                      # f32 b

    # VMEM budget (double-buffered tiles + weights); raise the scoped limit
    # only if it approaches the v5e 16 MiB default.
    vmem_est = (2 * bm * (D + L + HP) * 4
                + 2 * 2 * (D * L + L * H1 + H1 * H2 + H2 * HP)
                + 2 * 4 * (L + H1 + H2 + HP))
    vmem_limit = None
    if vmem_est > 12 * 1024 * 1024:
        vmem_limit = min(2 * vmem_est, 64 * 1024 * 1024)

    head, latent = pl.pallas_call(
        _sac_fused_kernel,
        out_shape=(jax.ShapeDtypeStruct((B_pad, HP), jnp.float32),
                   jax.ShapeDtypeStruct((B_pad, L), jnp.float32)),
        grid=grid,
        in_specs=[row(D),
                  rep((D, L)), rep((1, L)),
                  rep((L, H1)), rep((1, H1)),
                  rep((H1, H2)), rep((1, H2)),
                  rep((H2, HP)), rep((1, HP))],
        out_specs=(row(HP), row(L)),
        compiler_params=pltpu.CompilerParams(
            dimension_semantics=("parallel",),
            vmem_limit_bytes=vmem_limit),
        cost_estimate=pl.CostEstimate(flops=flops, transcendentals=0,
                                      bytes_accessed=bytes_accessed),
    )(obs_p, w_fc1, b_fc1, w_h1, b_h1, w_h2, b_h2, w_head, b_head)

    mu = head[:B, :A]
    log_std = head[:B, A:2 * A]
    latent = latent[:B]
    return mu, log_std, latent


# ---------------------------------------------------------------------------
# Parameter prep (PyTorch nn.Linear default init).
#   * Weights stored (in, out) and in bf16 (native MXU input dtype).
#   * mu / log_std head weights fused into one matrix and zero-padded to 128
#     lanes -> one MXU pass + lane-dense output stores; split in the wrapper.
#   * Biases stay f32 (bias-add / ReLU done in f32 on the VPU).
# ---------------------------------------------------------------------------
def init_params(key, obs_dim, latent_size, hidden_sizes, action_size):
    def linear(k, fan_in, fan_out):
        kw, kb = jax.random.split(k)
        bound = 1.0 / np.sqrt(fan_in)
        w = jax.random.uniform(kw, (fan_in, fan_out), jnp.float32, -bound, bound)
        b = jax.random.uniform(kb, (1, fan_out), jnp.float32, -bound, bound)
        return w, b

    h1, h2 = hidden_sizes
    k0, k1, k2, k3, k4 = jax.random.split(key, 5)
    w_fc1, b_fc1 = linear(k0, obs_dim, latent_size)
    w_h1, b_h1 = linear(k1, latent_size, h1)
    w_h2, b_h2 = linear(k2, h1, h2)
    w_mu, b_mu = linear(k3, h2, action_size)
    w_ls, b_ls = linear(k4, h2, action_size)

    A = action_size
    HP = max(128, _round_up(2 * A, 128))      # lane-dense padded head width
    w_head = (jnp.zeros((h2, HP), jnp.float32)
              .at[:, :A].set(w_mu)
              .at[:, A:2 * A].set(w_ls))
    b_head = (jnp.zeros((1, HP), jnp.float32)
              .at[:, :A].set(b_mu)
              .at[:, A:2 * A].set(b_ls))

    bf16 = jnp.bfloat16
    return {
        "w_fc1": w_fc1.astype(bf16), "b_fc1": b_fc1,
        "w_h1": w_h1.astype(bf16), "b_h1": b_h1,
        "w_h2": w_h2.astype(bf16), "b_h2": b_h2,
        "w_head": w_head.astype(bf16), "b_head": b_head,
    }


# Pure-JAX reference (same math & same bf16-stored weights, f32 activations).
def reference_forward(observation, params, action_size):
    f32 = lambda w: w.astype(jnp.float32)
    latent = observation @ f32(params["w_fc1"]) + params["b_fc1"]
    h = jnp.maximum(latent @ f32(params["w_h1"]) + params["b_h1"], 0.0)
    h = jnp.maximum(h @ f32(params["w_h2"]) + params["b_h2"], 0.0)
    head = h @ f32(params["w_head"]) + params["b_head"]
    mu = head[:, :action_size]
    log_std = head[:, action_size:2 * action_size]
    return mu, log_std, latent


if __name__ == "__main__":
    batch = 8
    obs_dim = 32
    latent_size = 128           # lane-dense latent
    hidden_sizes = (256, 256)   # rlpyt SAC default MLP widths, lane-dense
    action_size = 4

    key = jax.random.PRNGKey(0)
    kp, ko, ka, kr = jax.random.split(key, 4)
    params = init_params(kp, obs_dim, latent_size, hidden_sizes, action_size)
    observation = jax.random.normal(ko, (batch, obs_dim), jnp.float32)
    prev_action = jax.random.normal(ka, (batch, action_size), jnp.float32)
    prev_reward = jax.random.normal(kr, (batch,), jnp.float32)

    fwd = jax.jit(functools.partial(sac_noconv_forward,
                                    action_size=action_size))
    mu, log_std, latent = jax.block_until_ready(
        fwd(observation, prev_action, prev_reward, params))

    assert mu.shape == (batch, action_size), mu.shape
    assert log_std.shape == (batch, action_size), log_std.shape
    assert latent.shape == (batch, latent_size), latent.shape

    mu_r, ls_r, lat_r = reference_forward(observation, params, action_size)
    np.testing.assert_allclose(np.asarray(mu), np.asarray(mu_r),
                               atol=2e-2, rtol=2e-2)
    np.testing.assert_allclose(np.asarray(log_std), np.asarray(ls_r),
                               atol=2e-2, rtol=2e-2)
    np.testing.assert_allclose(np.asarray(latent), np.asarray(lat_r),
                               atol=2e-2, rtol=2e-2)
    assert bool(jnp.all(jnp.isfinite(mu)))
    assert bool(jnp.all(jnp.isfinite(log_std)))
    print("KERNEL_OK")
</pallas_src>

<mosaic_0001>
module attributes {stable_mosaic.version = 11 : i64} {
  func.func @_sac_fused_kernel(%arg0: i32, %arg1: memref<8x32xf32, #tpu.memory_space<vmem>>, %arg2: memref<32x128xbf16, #tpu.memory_space<vmem>>, %arg3: memref<1x128xf32, #tpu.memory_space<vmem>>, %arg4: memref<128x256xbf16, #tpu.memory_space<vmem>>, %arg5: memref<1x256xf32, #tpu.memory_space<vmem>>, %arg6: memref<256x256xbf16, #tpu.memory_space<vmem>>, %arg7: memref<1x256xf32, #tpu.memory_space<vmem>>, %arg8: memref<256x128xbf16, #tpu.memory_space<vmem>>, %arg9: memref<1x128xf32, #tpu.memory_space<vmem>>, %arg10: memref<8x128xf32, #tpu.memory_space<vmem>>, %arg11: memref<8x128xf32, #tpu.memory_space<vmem>>) attributes {dimension_semantics = [#tpu.dimension_semantics<parallel>], iteration_bounds = array<i64: 1>, scalar_prefetch = 0 : i64, scratch_operands = 0 : i64, tpu.core_type = #tpu.core_type<tc>, window_params = [{transform_indices = @transform_0, window_bounds = array<i64: 8, 32>}, {pipeline_mode = #tpu.pipeline_mode<synchronous>, transform_indices = @transform_1, window_bounds = array<i64: 32, 128>}, {pipeline_mode = #tpu.pipeline_mode<synchronous>, transform_indices = @transform_2, window_bounds = array<i64: 1, 128>}, {pipeline_mode = #tpu.pipeline_mode<synchronous>, transform_indices = @transform_3, window_bounds = array<i64: 128, 256>}, {pipeline_mode = #tpu.pipeline_mode<synchronous>, transform_indices = @transform_4, window_bounds = array<i64: 1, 256>}, {pipeline_mode = #tpu.pipeline_mode<synchronous>, transform_indices = @transform_5, window_bounds = array<i64: 256, 256>}, {pipeline_mode = #tpu.pipeline_mode<synchronous>, transform_indices = @transform_6, window_bounds = array<i64: 1, 256>}, {pipeline_mode = #tpu.pipeline_mode<synchronous>, transform_indices = @transform_7, window_bounds = array<i64: 256, 128>}, {pipeline_mode = #tpu.pipeline_mode<synchronous>, transform_indices = @transform_8, window_bounds = array<i64: 1, 128>}, {transform_indices = @transform_9, window_bounds = array<i64: 8, 128>}, {transform_indices = @transform_10, window_bounds = array<i64: 8, 128>}]} {
    %c0 = arith.constant 0 : index
    %c0_0 = arith.constant 0 : index
    %0 = vector.load %arg1[%c0, %c0_0] : memref<8x32xf32, #tpu.memory_space<vmem>>, vector<8x32xf32>
    %1 = arith.truncf %0 : vector<8x32xf32> to vector<8x32xbf16>
    %c0_1 = arith.constant 0 : index
    %c0_2 = arith.constant 0 : index
    %2 = vector.load %arg2[%c0_1, %c0_2] : memref<32x128xbf16, #tpu.memory_space<vmem>>, vector<32x128xbf16>
    %cst = arith.constant dense<0.000000e+00> : vector<8x128xf32>
    %3 = tpu.matmul %1, %2, %cst {dimension_numbers = #tpu.dot_dimension_numbers<[1], [0], [0], [1], [0, 0, 1, 1], [], []>} : vector<8x32xbf16>, vector<32x128xbf16>, vector<8x128xf32> -> vector<8x128xf32>
    %c0_3 = arith.constant 0 : index
    %c0_4 = arith.constant 0 : index
    %4 = vector.load %arg3[%c0_3, %c0_4] : memref<1x128xf32, #tpu.memory_space<vmem>>, vector<1x128xf32>
    %5 = vector.broadcast %4 : vector<1x128xf32> to vector<8x128xf32>
    %6 = arith.addf %3, %5 : vector<8x128xf32>
    %c0_5 = arith.constant 0 : index
    %c0_6 = arith.constant 0 : index
    %7 = vector.load %arg11[%c0_5, %c0_6] : memref<8x128xf32, #tpu.memory_space<vmem>>, vector<8x128xf32>
    tpu.vector_store %arg11[%c0_5, %c0_6], %6 {strides = array<i32>} : memref<8x128xf32, #tpu.memory_space<vmem>>, vector<8x128xf32>,
    %8 = arith.truncf %6 : vector<8x128xf32> to vector<8x128xbf16>
    %c0_7 = arith.constant 0 : index
    %c0_8 = arith.constant 0 : index
    %9 = vector.load %arg4[%c0_7, %c0_8] : memref<128x256xbf16, #tpu.memory_space<vmem>>, vector<128x256xbf16>
    %cst_9 = arith.constant dense<0.000000e+00> : vector<8x256xf32>
    %10 = tpu.matmul %8, %9, %cst_9 {dimension_numbers = #tpu.dot_dimension_numbers<[1], [0], [0], [1], [0, 0, 1, 1], [], []>} : vector<8x128xbf16>, vector<128x256xbf16>, vector<8x256xf32> -> vector<8x256xf32>
    %c0_10 = arith.constant 0 : index
    %c0_11 = arith.constant 0 : index
    %11 = vector.load %arg5[%c0_10, %c0_11] : memref<1x256xf32, #tpu.memory_space<vmem>>, vector<1x256xf32>
    %12 = vector.broadcast %11 : vector<1x256xf32> to vector<8x256xf32>
    %13 = arith.addf %10, %12 : vector<8x256xf32>
    %cst_12 = arith.constant 0.000000e+00 : f32
    %14 = vector.broadcast %cst_12 : f32 to vector<8x256xf32>
    %15 = arith.maximumf %13, %14 : vector<8x256xf32>
    %16 = arith.truncf %15 : vector<8x256xf32> to vector<8x256xbf16>
    %c0_13 = arith.constant 0 : index
    %c0_14 = arith.constant 0 : index
    %17 = vector.load %arg6[%c0_13, %c0_14] : memref<256x256xbf16, #tpu.memory_space<vmem>>, vector<256x256xbf16>
    %cst_15 = arith.constant dense<0.000000e+00> : vector<8x256xf32>
    %18 = tpu.matmul %16, %17, %cst_15 {dimension_numbers = #tpu.dot_dimension_numbers<[1], [0], [0], [1], [0, 0, 1, 1], [], []>} : vector<8x256xbf16>, vector<256x256xbf16>, vector<8x256xf32> -> vector<8x256xf32>
    %c0_16 = arith.constant 0 : index
    %c0_17 = arith.constant 0 : index
    %19 = vector.load %arg7[%c0_16, %c0_17] : memref<1x256xf32, #tpu.memory_space<vmem>>, vector<1x256xf32>
    %20 = vector.broadcast %19 : vector<1x256xf32> to vector<8x256xf32>
    %21 = arith.addf %18, %20 : vector<8x256xf32>
    %cst_18 = arith.constant 0.000000e+00 : f32
    %22 = vector.broadcast %cst_18 : f32 to vector<8x256xf32>
    %23 = arith.maximumf %21, %22 : vector<8x256xf32>
    %24 = arith.truncf %23 : vector<8x256xf32> to vector<8x256xbf16>
    %c0_19 = arith.constant 0 : index
    %c0_20 = arith.constant 0 : index
    %25 = vector.load %arg8[%c0_19, %c0_20] : memref<256x128xbf16, #tpu.memory_space<vmem>>, vector<256x128xbf16>
    %cst_21 = arith.constant dense<0.000000e+00> : vector<8x128xf32>
    %26 = tpu.matmul %24, %25, %cst_21 {dimension_numbers = #tpu.dot_dimension_numbers<[1], [0], [0], [1], [0, 0, 1, 1], [], []>} : vector<8x256xbf16>, vector<256x128xbf16>, vector<8x128xf32> -> vector<8x128xf32>
    %c0_22 = arith.constant 0 : index
    %c0_23 = arith.constant 0 : index
    %27 = vector.load %arg9[%c0_22, %c0_23] : memref<1x128xf32, #tpu.memory_space<vmem>>, vector<1x128xf32>
    %28 = vector.broadcast %27 : vector<1x128xf32> to vector<8x128xf32>
    %29 = arith.addf %26, %28 : vector<8x128xf32>
    %c0_24 = arith.constant 0 : index
    %c0_25 = arith.constant 0 : index
    %30 = vector.load %arg10[%c0_24, %c0_25] : memref<8x128xf32, #tpu.memory_space<vmem>>, vector<8x128xf32>
    tpu.vector_store %arg10[%c0_24, %c0_25], %29 {strides = array<i32>} : memref<8x128xf32, #tpu.memory_space<vmem>>, vector<8x128xf32>,
    return
  }
  func.func @transform_0(%arg0: i32) -> (i32, i32) {
    %c0_i32 = arith.constant 0 : i32
    %c0_i32_0 = arith.constant 0 : i32
    return %arg0, %c0_i32 : i32, i32
  }
  func.func @transform_1(%arg0: i32) -> (i32, i32) {
    %c0_i32 = arith.constant 0 : i32
    %c0_i32_0 = arith.constant 0 : i32
    %c0_i32_1 = arith.constant 0 : i32
    return %c0_i32, %c0_i32_0 : i32, i32
  }
  func.func @transform_2(%arg0: i32) -> (i32, i32) {
    %c0_i32 = arith.constant 0 : i32
    %c0_i32_0 = arith.constant 0 : i32
    %c0_i32_1 = arith.constant 0 : i32
    return %c0_i32, %c0_i32_0 : i32, i32
  }
  func.func @transform_3(%arg0: i32) -> (i32, i32) {
    %c0_i32 = arith.constant 0 : i32
    %c0_i32_0 = arith.constant 0 : i32
    %c0_i32_1 = arith.constant 0 : i32
    return %c0_i32, %c0_i32_0 : i32, i32
  }
  func.func @transform_4(%arg0: i32) -> (i32, i32) {
    %c0_i32 = arith.constant 0 : i32
    %c0_i32_0 = arith.constant 0 : i32
    %c0_i32_1 = arith.constant 0 : i32
    return %c0_i32, %c0_i32_0 : i32, i32
  }
  func.func @transform_5(%arg0: i32) -> (i32, i32) {
    %c0_i32 = arith.constant 0 : i32
    %c0_i32_0 = arith.constant 0 : i32
    %c0_i32_1 = arith.constant 0 : i32
    return %c0_i32, %c0_i32_0 : i32, i32
  }
  func.func @transform_6(%arg0: i32) -> (i32, i32) {
    %c0_i32 = arith.constant 0 : i32
    %c0_i32_0 = arith.constant 0 : i32
    %c0_i32_1 = arith.constant 0 : i32
    return %c0_i32, %c0_i32_0 : i32, i32
  }
  func.func @transform_7(%arg0: i32) -> (i32, i32) {
    %c0_i32 = arith.constant 0 : i32
    %c0_i32_0 = arith.constant 0 : i32
    %c0_i32_1 = arith.constant 0 : i32
    return %c0_i32, %c0_i32_0 : i32, i32
  }
  func.func @transform_8(%arg0: i32) -> (i32, i32) {
    %c0_i32 = arith.constant 0 : i32
    %c0_i32_0 = arith.constant 0 : i32
    %c0_i32_1 = arith.constant 0 : i32
    return %c0_i32, %c0_i32_0 : i32, i32
  }
  func.func @transform_9(%arg0: i32) -> (i32, i32) {
    %c0_i32 = arith.constant 0 : i32
    %c0_i32_0 = arith.constant 0 : i32
    return %arg0, %c0_i32 : i32, i32
  }
  func.func @transform_10(%arg0: i32) -> (i32, i32) {
    %c0_i32 = arith.constant 0 : i32
    %c0_i32_0 = arith.constant 0 : i32
    return %arg0, %c0_i32 : i32, i32
  }
}

</mosaic_0001>

<llo_original>
// kernel: sac_noconv_forward.1
$region0: #{sac_noconv_forward.1}
  #allocation0 [shape = 'u32[]', space=smem, size = 0x4, offset = 0x4, fixed_abs, tag = 'smem constant byte address 0x4 - core index']
  #allocation1 [shape = 'u32[72,128]{1,0:T(1,128)}', space=vmem, size = 0x9000, scoped, tag = 'internal scratch']
  %s0 = inlined_call_operand.hbm [shape: f32[8,32], index: 0, kind: input, shape index: {}]
  %s1 = inlined_call_operand.hbm [shape: bf16[32,128], index: 1, kind: input, shape index: {}]
  %s2 = inlined_call_operand.hbm [shape: f32[1,128], index: 2, kind: input, shape index: {}]
  %s3 = inlined_call_operand.hbm [shape: bf16[128,256], index: 3, kind: input, shape index: {}]
  %s4 = inlined_call_operand.hbm [shape: f32[1,256], index: 4, kind: input, shape index: {}]
  %s5 = inlined_call_operand.hbm [shape: bf16[256,256], index: 5, kind: input, shape index: {}]
  %s6 = inlined_call_operand.vmem [shape: f32[1,256], index: 6, kind: input, shape index: {}]
  %s7 = inlined_call_operand.hbm [shape: bf16[256,128], index: 7, kind: input, shape index: {}]
  %s8 = inlined_call_operand.vmem [shape: f32[1,128], index: 8, kind: input, shape index: {}]
  %s9 = inlined_call_operand.vmem [shape: f32[8,128], index: 9, kind: output, shape index: {0}]
  %s10 = inlined_call_operand.hbm [shape: f32[8,128], index: 10, kind: output, shape index: {1}]
  %11 = xla_tuple %s9, %s10
  %s12 = sld [smem:[#allocation0]]
  $region82: #{sac_noconv_forward.1} parent=0
    _
  %s14 = ssub.s32 1, %s12
  %s15 = scalar_select 0, %s14, %s12
  $region1: #{sac_noconv_forward.1} parent=0
    #allocation2 [shape = 'u8[4096]{0}', space=vmem, size = 0x1000, scoped, tag = 'input window, operand 0, single buffered']
    #allocation3 [shape = 's32[1]{0}', space=sflag, size = 0x4, scoped, tag = 'scoped memory for sac_noconv_forward.1']
    #allocation4 [shape = 's32[1]{0}', space=sflag, size = 0x4, scoped, tag = 'scoped memory for sac_noconv_forward.1']
    #allocation5 [shape = 'u8[8192]{0}', space=vmem, size = 0x2000, scoped, tag = 'input window, operand 1, single buffered']
    #allocation6 [shape = 's32[1]{0}', space=sflag, size = 0x4, scoped, tag = 'scoped memory for sac_noconv_forward.1']
    #allocation7 [shape = 'u8[512]{0}', space=vmem, size = 0x400, scoped, tag = 'input window, operand 2, single buffered']
    #allocation8 [shape = 'u8[65536]{0}', space=vmem, size = 0x10000, scoped, tag = 'input window, operand 3, single buffered']
    #allocation9 [shape = 's32[1]{0}', space=sflag, size = 0x4, scoped, tag = 'scoped memory for sac_noconv_forward.1']
    #allocation10 [shape = 'u8[1024]{0}', space=vmem, size = 0x400, scoped, tag = 'input window, operand 4, single buffered']
    #allocation11 [shape = 'u8[131072]{0}', space=vmem, size = 0x20000, scoped, tag = 'input window, operand 5, single buffered']
    #allocation12 [shape = 's32[1]{0}', space=sflag, size = 0x4, scoped, tag = 'scoped memory for sac_noconv_forward.1']
    #allocation13 [shape = 'u8[65536]{0}', space=vmem, size = 0x10000, scoped, tag = 'input window, operand 7, single buffered']
    #allocation14 [shape = 'u8[4096]{0}', space=vmem, size = 0x1000, scoped, tag = 'output window, operand 1, single buffered']
    %16 = vsyncpa [#allocation3], 0
    %17 = vsyncpa [#allocation6], 0
    %18 = vsyncpa [#allocation9], 0
    %19 = vsyncpa [#allocation12], 0
    %20 = vsyncpa [#allocation4], 0
    // Predicated region
    $region2: #{sac_noconv_forward.1} parent=1 // pred_check
      _
    $region3: #{sac_noconv_forward.1} parent=1 // pred_check_branch
      %22 = sbr.rel (0) target = $region5
    $region4: #{sac_noconv_forward.1} parent=1 // pred_region
      %24 = vsyncadd [#allocation3], 0
      %s26 = sshll.u32 %s0, 4
      %s27 = int_to_ptr.hbm [resolvable:$true] %s26
      %s28 = sshll.u32 [#allocation2], 4
      %s29 = int_to_ptr.vmem [resolvable:$true] %s28
      %31 = dma.hbm_to_vmem [thread:$0]  %s27, 128, %s29, [#allocation3]
    $region5: #{sac_noconv_forward.1} parent=1 // pred_fallthru
      _
    // Predicated region
    $region6: #{sac_noconv_forward.1} parent=1 // pred_check
      _
    $region7: #{sac_noconv_forward.1} parent=1 // pred_check_branch
      %33 = sbr.rel (0) target = $region9
    $region8: #{sac_noconv_forward.1} parent=1 // pred_region
      %35 = vsyncadd [#allocation6], 0
      %s36 = sshll.u32 %s1, 4
      %s37 = int_to_ptr.hbm [resolvable:$true] %s36
      %s38 = sshll.u32 [#allocation5], 4
      %s39 = int_to_ptr.vmem [resolvable:$true] %s38
      %44 = dma.hbm_to_vmem [thread:$0]  %s37, 256, %s39, [#allocation6], 64, 64, 4
    $region9: #{sac_noconv_forward.1} parent=1 // pred_fallthru
      _
    // Predicated region
    $region10: #{sac_noconv_forward.1} parent=1 // pred_check
      _
    $region11: #{sac_noconv_forward.1} parent=1 // pred_check_branch
      %46 = sbr.rel (0) target = $region13
    $region12: #{sac_noconv_forward.1} parent=1 // pred_region
      %48 = vsyncadd [#allocation6], 0
      %s50 = sshll.u32 %s2, 4
      %s51 = int_to_ptr.hbm [resolvable:$true] %s50
      %s52 = sshll.u32 [#allocation7], 4
      %s53 = int_to_ptr.vmem [resolvable:$true] %s52
      %55 = dma.hbm_to_vmem [thread:$0]  %s51, 16, %s53, [#allocation6]
    $region13: #{sac_noconv_forward.1} parent=1 // pred_fallthru
      _
    // Predicated region
    $region14: #{sac_noconv_forward.1} parent=1 // pred_check
      _
    $region15: #{sac_noconv_forward.1} parent=1 // pred_check_branch
      %57 = sbr.rel (0) target = $region17
    $region16: #{sac_noconv_forward.1} parent=1 // pred_region
      %59 = vsyncadd [#allocation9], 0
      %s60 = sshll.u32 %s3, 4
      %s61 = int_to_ptr.hbm [resolvable:$true] %s60
      %s62 = sshll.u32 [#allocation8], 4
      %s63 = int_to_ptr.vmem [resolvable:$true] %s62
      %68 = dma.hbm_to_vmem [thread:$0]  %s61, 2048, %s63, [#allocation9], 128, 128, 8
    $region17: #{sac_noconv_forward.1} parent=1 // pred_fallthru
      _
    // Predicated region
    $region18: #{sac_noconv_forward.1} parent=1 // pred_check
      _
    $region19: #{sac_noconv_forward.1} parent=1 // pred_check_branch
      %70 = sbr.rel (0) target = $region21
    $region20: #{sac_noconv_forward.1} parent=1 // pred_region
      %72 = vsyncadd [#allocation9], 0
      %s74 = sshll.u32 %s4, 4
      %s75 = int_to_ptr.hbm [resolvable:$true] %s74
      %s76 = sshll.u32 [#allocation10], 4
      %s77 = int_to_ptr.vmem [resolvable:$true] %s76
      %79 = dma.hbm_to_vmem [thread:$0]  %s75, 32, %s77, [#allocation9]
    $region21: #{sac_noconv_forward.1} parent=1 // pred_fallthru
      _
    // Predicated region
    $region22: #{sac_noconv_forward.1} parent=1 // pred_check
      _
    $region23: #{sac_noconv_forward.1} parent=1 // pred_check_branch
      %81 = sbr.rel (0) target = $region25
    $region24: #{sac_noconv_forward.1} parent=1 // pred_region
      %83 = vsyncadd [#allocation12], 0
      %s84 = sshll.u32 %s5, 4
      %s85 = int_to_ptr.hbm [resolvable:$true] %s84
      %s86 = sshll.u32 [#allocation11], 4
      %s87 = int_to_ptr.vmem [resolvable:$true] %s86
      %92 = dma.hbm_to_vmem [thread:$0]  %s85, 4096, %s87, [#allocation12], 128, 128, 8
    $region25: #{sac_noconv_forward.1} parent=1 // pred_fallthru
      _
    // Predicated region
    $region26: #{sac_noconv_forward.1} parent=1 // pred_check
      _
    $region27: #{sac_noconv_forward.1} parent=1 // pred_check_branch
      %94 = sbr.rel (0) target = $region29
    $region28: #{sac_noconv_forward.1} parent=1 // pred_region
      _
    $region29: #{sac_noconv_forward.1} parent=1 // pred_fallthru
      _
    // Predicated region
    $region30: #{sac_noconv_forward.1} parent=1 // pred_check
      _
    $region31: #{sac_noconv_forward.1} parent=1 // pred_check_branch
      %96 = sbr.rel (0) target = $region33
    $region32: #{sac_noconv_forward.1} parent=1 // pred_region
      %98 = vsyncadd [#allocation12], 0
      %s99 = sshll.u32 %s7, 4
      %s100 = int_to_ptr.hbm [resolvable:$true] %s99
      %s101 = sshll.u32 [#allocation13], 4
      %s102 = int_to_ptr.vmem [resolvable:$true] %s101
      %107 = dma.hbm_to_vmem [thread:$0]  %s100, 2048, %s102, [#allocation12], 64, 64, 4
    $region33: #{sac_noconv_forward.1} parent=1 // pred_fallthru
      _
    // Predicated region
    $region34: #{sac_noconv_forward.1} parent=1 // pred_check
      _
    $region35: #{sac_noconv_forward.1} parent=1 // pred_check_branch
      %109 = sbr.rel (0) target = $region37
    $region36: #{sac_noconv_forward.1} parent=1 // pred_region
      _
    $region37: #{sac_noconv_forward.1} parent=1 // pred_fallthru
      _
    // Predicated region
    $region38: #{sac_noconv_forward.1} parent=1 // pred_check
      _
    $region39: #{sac_noconv_forward.1} parent=1 // pred_check_branch
      %111 = sbr.rel (0) target = $region41
    $region40: #{sac_noconv_forward.1} parent=1 // pred_region
      %113 = dma.done [#allocation3], 128
    $region41: #{sac_noconv_forward.1} parent=1 // pred_fallthru
      _
    // Predicated region
    $region42: #{sac_noconv_forward.1} parent=1 // pred_check
      _
    $region43: #{sac_noconv_forward.1} parent=1 // pred_check_branch
      %115 = sbr.rel (0) target = $region45
    $region44: #{sac_noconv_forward.1} parent=1 // pred_region
      %117 = dma.done [#allocation6], 256
    $region45: #{sac_noconv_forward.1} parent=1 // pred_fallthru
      _
    // Predicated region
    $region46: #{sac_noconv_forward.1} parent=1 // pred_check
      _
    $region47: #{sac_noconv_forward.1} parent=1 // pred_check_branch
      %119 = sbr.rel (0) target = $region49
    $region48: #{sac_noconv_forward.1} parent=1 // pred_region
      %121 = dma.done [#allocation6], 16
    $region49: #{sac_noconv_forward.1} parent=1 // pred_fallthru
      _
    // Predicated region
    $region50: #{sac_noconv_forward.1} parent=1 // pred_check
      _
    $region51: #{sac_noconv_forward.1} parent=1 // pred_check_branch
      %123 = sbr.rel (0) target = $region53
    $region52: #{sac_noconv_forward.1} parent=1 // pred_region
      %125 = dma.done [#allocation9], 2048
    $region53: #{sac_noconv_forward.1} parent=1 // pred_fallthru
      _
    // Predicated region
    $region54: #{sac_noconv_forward.1} parent=1 // pred_check
      _
    $region55: #{sac_noconv_forward.1} parent=1 // pred_check_branch
      %127 = sbr.rel (0) target = $region57
    $region56: #{sac_noconv_forward.1} parent=1 // pred_region
      %129 = dma.done [#allocation9], 32
    $region57: #{sac_noconv_forward.1} parent=1 // pred_fallthru
      _
    // Predicated region
    $region58: #{sac_noconv_forward.1} parent=1 // pred_check
      _
    $region59: #{sac_noconv_forward.1} parent=1 // pred_check_branch
      %131 = sbr.rel (0) target = $region61
    $region60: #{sac_noconv_forward.1} parent=1 // pred_region
      %133 = dma.done [#allocation12], 4096
    $region61: #{sac_noconv_forward.1} parent=1 // pred_fallthru
      _
    // Predicated region
    $region62: #{sac_noconv_forward.1} parent=1 // pred_check
      _
    $region63: #{sac_noconv_forward.1} parent=1 // pred_check_branch
      %135 = sbr.rel (0) target = $region65
    $region64: #{sac_noconv_forward.1} parent=1 // pred_region
      %137 = dma.done [#allocation12], 2048
    $region65: #{sac_noconv_forward.1} parent=1 // pred_fallthru
      _
    %v139 = vld [vmem:[#allocation2] sm:$0xff]
    %v140 = vpack.c.bf16 %v139, %v139
    %v141 = vld [vmem:[#allocation5] sm:$0xf]
    %v142 = vld [vmem:[#allocation5 + $0x4] sm:$0xf]
    %v143 = vld [vmem:[#allocation5 + $0x8] sm:$0xf]
    %v144 = vld [vmem:[#allocation5 + $0xc] sm:$0xf]
    %v145 = vld [vmem:[#allocation7] sm:$0x1]
    %v147 = vperm.slane %v145, 0
    %v153 = vunpack.c.l.b16 %v141
    %v154 = vunpack.c.l.b16 %v142
    %v155 = vunpack.c.l.b16 %v143
    %v156 = vunpack.c.l.b16 %v144
    %v157 = vpack.c.b16 %v154, %v153
    %v158 = vpack.c.b16 %v156, %v155
    %vm161 = vcmask 261120
    %v163 = vsel %vm161, %v140, 0
    %165 = vmatpush.bf16.msra.mxu0 0
    %166 = vmatpush.bf16.msra.mxu0 0
    %167 = vmatpush.bf16.msra.mxu0 0
    %168 = vmatpush.bf16.msra.mxu0 0
    %169 = vmatpush.bf16.msra.mxu0 0
    %170 = vmatpush.bf16.msra.mxu0 0
    %171 = vmatpush.bf16.msra.mxu0 %v158
    %172 = vmatpush.bf16.msra.mxu0 %v157
    %173 = vmatmul.bf16.gmra.mxu0 %v163
    %v174 = vpop.f32.mrf.mxu0
    %v175 = vadd.f32 %v147, %v174
    %v176 = vpop.f32.mrf.mxu0
    %177 = vdwg.mxu0
    %178 = vst [vmem:[#allocation14] sm:$0xff] %v175
    %v179 = vpack.c.bf16 %v175, %v175
    %v180 = vld [vmem:[#allocation8] sm:$0xff]
    %v181 = vld [vmem:[#allocation8 + $0x8] sm:$0xff]
    %v182 = vld [vmem:[#allocation8 + $0x10] sm:$0xff]
    %v183 = vld [vmem:[#allocation8 + $0x18] sm:$0xff]
    %v184 = vld [vmem:[#allocation8 + $0x20] sm:$0xff]
    %v185 = vld [vmem:[#allocation8 + $0x28] sm:$0xff]
    %v186 = vld [vmem:[#allocation8 + $0x30] sm:$0xff]
    %v187 = vld [vmem:[#allocation8 + $0x38] sm:$0xff]
    %v188 = vld [vmem:[#allocation8 + $0x40] sm:$0xff]
    %v189 = vld [vmem:[#allocation8 + $0x48] sm:$0xff]
    %v190 = vld [vmem:[#allocation8 + $0x50] sm:$0xff]
    %v191 = vld [vmem:[#allocation8 + $0x58] sm:$0xff]
    %v192 = vld [vmem:[#allocation8 + $0x60] sm:$0xff]
    %v193 = vld [vmem:[#allocation8 + $0x68] sm:$0xff]
    %v194 = vld [vmem:[#allocation8 + $0x70] sm:$0xff]
    %v195 = vld [vmem:[#allocation8 + $0x78] sm:$0xff]
    %v196 = vld [vmem:[#allocation10] sm:$0x3]
    %v198 = vperm.slane %v196, 0
    %v199 = vperm.slane %v196, 1
    %v218 = vunpack.c.l.b16 %v180
    %v219 = vunpack.c.h.b16 %v180
    %v220 = vunpack.c.l.b16 %v181
    %v221 = vunpack.c.h.b16 %v181
    %v222 = vunpack.c.l.b16 %v182
    %v223 = vunpack.c.h.b16 %v182
    %v224 = vunpack.c.l.b16 %v183
    %v225 = vunpack.c.h.b16 %v183
    %v226 = vunpack.c.l.b16 %v184
    %v227 = vunpack.c.h.b16 %v184
    %v228 = vunpack.c.l.b16 %v185
    %v229 = vunpack.c.h.b16 %v185
    %v230 = vunpack.c.l.b16 %v186
    %v231 = vunpack.c.h.b16 %v186
    %v232 = vunpack.c.l.b16 %v187
    %v233 = vunpack.c.h.b16 %v187
    %v234 = vunpack.c.l.b16 %v188
    %v235 = vunpack.c.h.b16 %v188
    %v236 = vunpack.c.l.b16 %v189
    %v237 = vunpack.c.h.b16 %v189
    %v238 = vunpack.c.l.b16 %v190
    %v239 = vunpack.c.h.b16 %v190
    %v240 = vunpack.c.l.b16 %v191
    %v241 = vunpack.c.h.b16 %v191
    %v242 = vunpack.c.l.b16 %v192
    %v243 = vunpack.c.h.b16 %v192
    %v244 = vunpack.c.l.b16 %v193
    %v245 = vunpack.c.h.b16 %v193
    %v246 = vunpack.c.l.b16 %v194
    %v247 = vunpack.c.h.b16 %v194
    %v248 = vunpack.c.l.b16 %v195
    %v249 = vunpack.c.h.b16 %v195
    %v250 = vpack.c.b16 %v220, %v218
    %v251 = vpack.c.b16 %v221, %v219
    %v252 = vpack.c.b16 %v224, %v222
    %v253 = vpack.c.b16 %v225, %v223
    %v254 = vpack.c.b16 %v228, %v226
    %v255 = vpack.c.b16 %v229, %v227
    %v256 = vpack.c.b16 %v232, %v230
    %v257 = vpack.c.b16 %v233, %v231
    %v258 = vpack.c.b16 %v236, %v234
    %v259 = vpack.c.b16 %v237, %v235
    %v260 = vpack.c.b16 %v240, %v238
    %v261 = vpack.c.b16 %v241, %v239
    %v262 = vpack.c.b16 %v244, %v242
    %v263 = vpack.c.b16 %v245, %v243
    %v264 = vpack.c.b16 %v248, %v246
    %v265 = vpack.c.b16 %v249, %v247
    %282 = vmatpush.bf16.msra.mxu0 %v264
    %283 = vmatpush.bf16.msra.mxu0 %v262
    %284 = vmatpush.bf16.msra.mxu0 %v260
    %285 = vmatpush.bf16.msra.mxu0 %v258
    %286 = vmatpush.bf16.msra.mxu0 %v256
    %287 = vmatpush.bf16.msra.mxu0 %v254
    %288 = vmatpush.bf16.msra.mxu0 %v252
    %289 = vmatpush.bf16.msra.mxu0 %v250
    %290 = vmatmul.bf16.gmra.mxu0 %v179
    %v291 = vpop.f32.mrf.mxu0
    %v292 = vadd.f32 %v198, %v291
    %v293 = vpop.f32.mrf.mxu0
    %294 = vdwg.mxu0
    %295 = vmatpush.bf16.msra.mxu0 %v265
    %296 = vmatpush.bf16.msra.mxu0 %v263
    %297 = vmatpush.bf16.msra.mxu0 %v261
    %298 = vmatpush.bf16.msra.mxu0 %v259
    %299 = vmatpush.bf16.msra.mxu0 %v257
    %300 = vmatpush.bf16.msra.mxu0 %v255
    %301 = vmatpush.bf16.msra.mxu0 %v253
    %302 = vmatpush.bf16.msra.mxu0 %v251
    %303 = vmatmul.bf16.gmra.mxu0 %v179
    %v304 = vpop.f32.mrf.mxu0
    %v305 = vadd.f32 %v199, %v304
    %v306 = vpop.f32.mrf.mxu0
    %307 = vdwg.mxu0
    %v308 = vmax.f32 %v292, 0.0
    %v309 = vmax.f32 %v305, 0.0
    %v310 = vpack.c.bf16 %v308, %v308
    %v311 = vpack.c.bf16 %v309, %v309
    %v312 = vld [vmem:[#allocation11] sm:$0xff]
    %v313 = vld [vmem:[#allocation11 + $0x8] sm:$0xff]
    %v314 = vld [vmem:[#allocation11 + $0x10] sm:$0xff]
    %v315 = vld [vmem:[#allocation11 + $0x18] sm:$0xff]
    %v316 = vld [vmem:[#allocation11 + $0x20] sm:$0xff]
    %v317 = vld [vmem:[#allocation11 + $0x28] sm:$0xff]
    %v318 = vld [vmem:[#allocation11 + $0x30] sm:$0xff]
    %v319 = vld [vmem:[#allocation11 + $0x38] sm:$0xff]
    %v320 = vld [vmem:[#allocation11 + $0x40] sm:$0xff]
    %v321 = vld [vmem:[#allocation11 + $0x48] sm:$0xff]
    %v322 = vld [vmem:[#allocation11 + $0x50] sm:$0xff]
    %v323 = vld [vmem:[#allocation11 + $0x58] sm:$0xff]
    %v324 = vld [vmem:[#allocation11 + $0x60] sm:$0xff]
    %v325 = vld [vmem:[#allocation11 + $0x68] sm:$0xff]
    %v326 = vld [vmem:[#allocation11 + $0x70] sm:$0xff]
    %v327 = vld [vmem:[#allocation11 + $0x78] sm:$0xff]
    %v328 = vld [vmem:[#allocation11 + $0x80] sm:$0xff]
    %v329 = vld [vmem:[#allocation11 + $0x88] sm:$0xff]
    %v330 = vld [vmem:[#allocation11 + $0x90] sm:$0xff]
    %v331 = vld [vmem:[#allocation11 + $0x98] sm:$0xff]
    %v332 = vld [vmem:[#allocation11 + $0xa0] sm:$0xff]
    %v333 = vld [vmem:[#allocation11 + $0xa8] sm:$0xff]
    %v334 = vld [vmem:[#allocation11 + $0xb0] sm:$0xff]
    %v335 = vld [vmem:[#allocation11 + $0xb8] sm:$0xff]
    %v336 = vld [vmem:[#allocation11 + $0xc0] sm:$0xff]
    %v337 = vld [vmem:[#allocation11 + $0xc8] sm:$0xff]
    %v338 = vld [vmem:[#allocation11 + $0xd0] sm:$0xff]
    %v339 = vld [vmem:[#allocation11 + $0xd8] sm:$0xff]
    %v340 = vld [vmem:[#allocation11 + $0xe0] sm:$0xff]
    %v341 = vld [vmem:[#allocation11 + $0xe8] sm:$0xff]
    %v342 = vld [vmem:[#allocation11 + $0xf0] sm:$0xff]
    %v343 = vld [vmem:[#allocation11 + $0xf8] sm:$0xff]
    %v344 = vld [vmem:[%s6] sm:$0x3]
    %v346 = vperm.slane %v344, 0
    %v347 = vperm.slane %v344, 1
    %v382 = vunpack.c.l.b16 %v312
    %v383 = vunpack.c.h.b16 %v312
    %v384 = vunpack.c.l.b16 %v313
    %v385 = vunpack.c.h.b16 %v313
    %v386 = vunpack.c.l.b16 %v314
    %v387 = vunpack.c.h.b16 %v314
    %v388 = vunpack.c.l.b16 %v315
    %v389 = vunpack.c.h.b16 %v315
    %v390 = vunpack.c.l.b16 %v316
    %v391 = vunpack.c.h.b16 %v316
    %v392 = vunpack.c.l.b16 %v317
    %v393 = vunpack.c.h.b16 %v317
    %v394 = vunpack.c.l.b16 %v318
    %v395 = vunpack.c.h.b16 %v318
    %v396 = vunpack.c.l.b16 %v319
    %v397 = vunpack.c.h.b16 %v319
    %v398 = vunpack.c.l.b16 %v320
    %v399 = vunpack.c.h.b16 %v320
    %v400 = vunpack.c.l.b16 %v321
    %v401 = vunpack.c.h.b16 %v321
    %v402 = vunpack.c.l.b16 %v322
    %v403 = vunpack.c.h.b16 %v322
    %v404 = vunpack.c.l.b16 %v323
    %v405 = vunpack.c.h.b16 %v323
    %v406 = vunpack.c.l.b16 %v324
    %v407 = vunpack.c.h.b16 %v324
    %v408 = vunpack.c.l.b16 %v325
    %v409 = vunpack.c.h.b16 %v325
    %v410 = vunpack.c.l.b16 %v326
    %v411 = vunpack.c.h.b16 %v326
    %v412 = vunpack.c.l.b16 %v327
    %v413 = vunpack.c.h.b16 %v327
    %v414 = vunpack.c.l.b16 %v328
    %v415 = vunpack.c.h.b16 %v328
    %v416 = vunpack.c.l.b16 %v329
    %v417 = vunpack.c.h.b16 %v329
    %v418 = vunpack.c.l.b16 %v330
    %v419 = vunpack.c.h.b16 %v330
    %v420 = vunpack.c.l.b16 %v331
    %v421 = vunpack.c.h.b16 %v331
    %v422 = vunpack.c.l.b16 %v332
    %v423 = vunpack.c.h.b16 %v332
    %v424 = vunpack.c.l.b16 %v333
    %v425 = vunpack.c.h.b16 %v333
    %v426 = vunpack.c.l.b16 %v334
    %v427 = vunpack.c.h.b16 %v334
    %v428 = vunpack.c.l.b16 %v335
    %v429 = vunpack.c.h.b16 %v335
    %v430 = vunpack.c.l.b16 %v336
    %v431 = vunpack.c.h.b16 %v336
    %v432 = vunpack.c.l.b16 %v337
    %v433 = vunpack.c.h.b16 %v337
    %v434 = vunpack.c.l.b16 %v338
    %v435 = vunpack.c.h.b16 %v338
    %v436 = vunpack.c.l.b16 %v339
    %v437 = vunpack.c.h.b16 %v339
    %v438 = vunpack.c.l.b16 %v340
    %v439 = vunpack.c.h.b16 %v340
    %v440 = vunpack.c.l.b16 %v341
    %v441 = vunpack.c.h.b16 %v341
    %v442 = vunpack.c.l.b16 %v342
    %v443 = vunpack.c.h.b16 %v342
    %v444 = vunpack.c.l.b16 %v343
    %v445 = vunpack.c.h.b16 %v343
    %v446 = vpack.c.b16 %v384, %v382
    %v447 = vpack.c.b16 %v385, %v383
    %v448 = vpack.c.b16 %v388, %v386
    %v449 = vpack.c.b16 %v389, %v387
    %v450 = vpack.c.b16 %v392, %v390
    %v451 = vpack.c.b16 %v393, %v391
    %v452 = vpack.c.b16 %v396, %v394
    %v453 = vpack.c.b16 %v397, %v395
    %v454 = vpack.c.b16 %v400, %v398
    %v455 = vpack.c.b16 %v401, %v399
    %v456 = vpack.c.b16 %v404, %v402
    %v457 = vpack.c.b16 %v405, %v403
    %v458 = vpack.c.b16 %v408, %v406
    %v459 = vpack.c.b16 %v409, %v407
    %v460 = vpack.c.b16 %v412, %v410
    %v461 = vpack.c.b16 %v413, %v411
    %v462 = vpack.c.b16 %v416, %v414
    %v463 = vpack.c.b16 %v417, %v415
    %v464 = vpack.c.b16 %v420, %v418
    %v465 = vpack.c.b16 %v421, %v419
    %v466 = vpack.c.b16 %v424, %v422
    %v467 = vpack.c.b16 %v425, %v423
    %v468 = vpack.c.b16 %v428, %v426
    %v469 = vpack.c.b16 %v429, %v427
    %v470 = vpack.c.b16 %v432, %v430
    %v471 = vpack.c.b16 %v433, %v431
    %v472 = vpack.c.b16 %v436, %v434
    %v473 = vpack.c.b16 %v437, %v435
    %v474 = vpack.c.b16 %v440, %v438
    %v475 = vpack.c.b16 %v441, %v439
    %v476 = vpack.c.b16 %v444, %v442
    %v477 = vpack.c.b16 %v445, %v443
    %510 = vmatpush.bf16.msra.mxu0 %v460
    %511 = vmatpush.bf16.msra.mxu0 %v458
    %512 = vmatpush.bf16.msra.mxu0 %v456
    %513 = vmatpush.bf16.msra.mxu0 %v454
    %514 = vmatpush.bf16.msra.mxu0 %v452
    %515 = vmatpush.bf16.msra.mxu0 %v450
    %516 = vmatpush.bf16.msra.mxu0 %v448
    %517 = vmatpush.bf16.msra.mxu0 %v446
    %518 = vmatmul.bf16.gmra.mxu0 %v310
    %v519 = vpop.f32.mrf.mxu0
    %v520 = vadd.f32 %v346, %v519
    %v521 = vpop.f32.mrf.mxu0
    %522 = vdwg.mxu0
    %523 = vmatpush.bf16.msra.mxu0 %v476
    %524 = vmatpush.bf16.msra.mxu0 %v474
    %525 = vmatpush.bf16.msra.mxu0 %v472
    %526 = vmatpush.bf16.msra.mxu0 %v470
    %527 = vmatpush.bf16.msra.mxu0 %v468
    %528 = vmatpush.bf16.msra.mxu0 %v466
    %529 = vmatpush.bf16.msra.mxu0 %v464
    %530 = vmatpush.bf16.msra.mxu0 %v462
    %531 = vmatmul.bf16.gmra.mxu0 %v311
    %v532 = vpop.f32.mrf.mxu0
    %v533 = vadd.f32 %v520, %v532
    %v534 = vpop.f32.mrf.mxu0
    %535 = vdwg.mxu0
    %536 = vmatpush.bf16.msra.mxu0 %v461
    %537 = vmatpush.bf16.msra.mxu0 %v459
    %538 = vmatpush.bf16.msra.mxu0 %v457
    %539 = vmatpush.bf16.msra.mxu0 %v455
    %540 = vmatpush.bf16.msra.mxu0 %v453
    %541 = vmatpush.bf16.msra.mxu0 %v451
    %542 = vmatpush.bf16.msra.mxu0 %v449
    %543 = vmatpush.bf16.msra.mxu0 %v447
    %544 = vmatmul.bf16.gmra.mxu0 %v310
    %v545 = vpop.f32.mrf.mxu0
    %v546 = vadd.f32 %v347, %v545
    %v547 = vpop.f32.mrf.mxu0
    %548 = vdwg.mxu0
    %549 = vmatpush.bf16.msra.mxu0 %v477
    %550 = vmatpush.bf16.msra.mxu0 %v475
    %551 = vmatpush.bf16.msra.mxu0 %v473
    %552 = vmatpush.bf16.msra.mxu0 %v471
    %553 = vmatpush.bf16.msra.mxu0 %v469
    %554 = vmatpush.bf16.msra.mxu0 %v467
    %555 = vmatpush.bf16.msra.mxu0 %v465
    %556 = vmatpush.bf16.msra.mxu0 %v463
    %557 = vmatmul.bf16.gmra.mxu0 %v311
    %v558 = vpop.f32.mrf.mxu0
    %v559 = vadd.f32 %v546, %v558
    %v560 = vpop.f32.mrf.mxu0
    %561 = vdwg.mxu0
    %v562 = vmax.f32 %v533, 0.0
    %v563 = vmax.f32 %v559, 0.0
    %v564 = vpack.c.bf16 %v562, %v562
    %v565 = vpack.c.bf16 %v563, %v563
    %v566 = vld [vmem:[#allocation13] sm:$0xf]
    %v567 = vld [vmem:[#allocation13 + $0x4] sm:$0xf]
    %v568 = vld [vmem:[#allocation13 + $0x8] sm:$0xf]
    %v569 = vld [vmem:[#allocation13 + $0xc] sm:$0xf]
    %v570 = vld [vmem:[#allocation13 + $0x10] sm:$0xf]
    %v571 = vld [vmem:[#allocation13 + $0x14] sm:$0xf]
    %v572 = vld [vmem:[#allocation13 + $0x18] sm:$0xf]
    %v573 = vld [vmem:[#allocation13 + $0x1c] sm:$0xf]
    %v574 = vld [vmem:[#allocation13 + $0x20] sm:$0xf]
    %v575 = vld [vmem:[#allocation13 + $0x24] sm:$0xf]
    %v576 = vld [vmem:[#allocation13 + $0x28] sm:$0xf]
    %v577 = vld [vmem:[#allocation13 + $0x2c] sm:$0xf]
    %v578 = vld [vmem:[#allocation13 + $0x30] sm:$0xf]
    %v579 = vld [vmem:[#allocation13 + $0x34] sm:$0xf]
    %v580 = vld [vmem:[#allocation13 + $0x38] sm:$0xf]
    %v581 = vld [vmem:[#allocation13 + $0x3c] sm:$0xf]
    %v582 = vld [vmem:[#allocation13 + $0x40] sm:$0xf]
    %v583 = vld [vmem:[#allocation13 + $0x44] sm:$0xf]
    %v584 = vld [vmem:[#allocation13 + $0x48] sm:$0xf]
    %v585 = vld [vmem:[#allocation13 + $0x4c] sm:$0xf]
    %v586 = vld [vmem:[#allocation13 + $0x50] sm:$0xf]
    %v587 = vld [vmem:[#allocation13 + $0x54] sm:$0xf]
    %v588 = vld [vmem:[#allocation13 + $0x58] sm:$0xf]
    %v589 = vld [vmem:[#allocation13 + $0x5c] sm:$0xf]
    %v590 = vld [vmem:[#allocation13 + $0x60] sm:$0xf]
    %v591 = vld [vmem:[#allocation13 + $0x64] sm:$0xf]
    %v592 = vld [vmem:[#allocation13 + $0x68] sm:$0xf]
    %v593 = vld [vmem:[#allocation13 + $0x6c] sm:$0xf]
    %v594 = vld [vmem:[#allocation13 + $0x70] sm:$0xf]
    %v595 = vld [vmem:[#allocation13 + $0x74] sm:$0xf]
    %v596 = vld [vmem:[#allocation13 + $0x78] sm:$0xf]
    %v597 = vld [vmem:[#allocation13 + $0x7c] sm:$0xf]
    %v598 = vld [vmem:[%s8] sm:$0x1]
    %v600 = vperm.slane %v598, 0
    %v634 = vunpack.c.l.b16 %v566
    %v635 = vunpack.c.l.b16 %v567
    %v636 = vunpack.c.l.b16 %v568
    %v637 = vunpack.c.l.b16 %v569
    %v638 = vunpack.c.l.b16 %v570
    %v639 = vunpack.c.l.b16 %v571
    %v640 = vunpack.c.l.b16 %v572
    %v641 = vunpack.c.l.b16 %v573
    %v642 = vunpack.c.l.b16 %v574
    %v643 = vunpack.c.l.b16 %v575
    %v644 = vunpack.c.l.b16 %v576
    %v645 = vunpack.c.l.b16 %v577
    %v646 = vunpack.c.l.b16 %v578
    %v647 = vunpack.c.l.b16 %v579
    %v648 = vunpack.c.l.b16 %v580
    %v649 = vunpack.c.l.b16 %v581
    %v650 = vunpack.c.l.b16 %v582
    %v651 = vunpack.c.l.b16 %v583
    %v652 = vunpack.c.l.b16 %v584
    %v653 = vunpack.c.l.b16 %v585
    %v654 = vunpack.c.l.b16 %v586
    %v655 = vunpack.c.l.b16 %v587
    %v656 = vunpack.c.l.b16 %v588
    %v657 = vunpack.c.l.b16 %v589
    %v658 = vunpack.c.l.b16 %v590
    %v659 = vunpack.c.l.b16 %v591
    %v660 = vunpack.c.l.b16 %v592
    %v661 = vunpack.c.l.b16 %v593
    %v662 = vunpack.c.l.b16 %v594
    %v663 = vunpack.c.l.b16 %v595
    %v664 = vunpack.c.l.b16 %v596
    %v665 = vunpack.c.l.b16 %v597
    %v666 = vpack.c.b16 %v635, %v634
    %v667 = vpack.c.b16 %v637, %v636
    %v668 = vpack.c.b16 %v639, %v638
    %v669 = vpack.c.b16 %v641, %v640
    %v670 = vpack.c.b16 %v643, %v642
    %v671 = vpack.c.b16 %v645, %v644
    %v672 = vpack.c.b16 %v647, %v646
    %v673 = vpack.c.b16 %v649, %v648
    %v674 = vpack.c.b16 %v651, %v650
    %v675 = vpack.c.b16 %v653, %v652
    %v676 = vpack.c.b16 %v655, %v654
    %v677 = vpack.c.b16 %v657, %v656
    %v678 = vpack.c.b16 %v659, %v658
    %v679 = vpack.c.b16 %v661, %v660
    %v680 = vpack.c.b16 %v663, %v662
    %v681 = vpack.c.b16 %v665, %v664
    %698 = vmatpush.bf16.msra.mxu0 %v673
    %699 = vmatpush.bf16.msra.mxu0 %v672
    %700 = vmatpush.bf16.msra.mxu0 %v671
    %701 = vmatpush.bf16.msra.mxu0 %v670
    %702 = vmatpush.bf16.msra.mxu0 %v669
    %703 = vmatpush.bf16.msra.mxu0 %v668
    %704 = vmatpush.bf16.msra.mxu0 %v667
    %705 = vmatpush.bf16.msra.mxu0 %v666
    %706 = vmatmul.bf16.gmra.mxu0 %v564
    %v707 = vpop.f32.mrf.mxu0
    %v708 = vadd.f32 %v600, %v707
    %v709 = vpop.f32.mrf.mxu0
    %710 = vdwg.mxu0
    %711 = vmatpush.bf16.msra.mxu0 %v681
    %712 = vmatpush.bf16.msra.mxu0 %v680
    %713 = vmatpush.bf16.msra.mxu0 %v679
    %714 = vmatpush.bf16.msra.mxu0 %v678
    %715 = vmatpush.bf16.msra.mxu0 %v677
    %716 = vmatpush.bf16.msra.mxu0 %v676
    %717 = vmatpush.bf16.msra.mxu0 %v675
    %718 = vmatpush.bf16.msra.mxu0 %v674
    %719 = vmatmul.bf16.gmra.mxu0 %v565
    %v720 = vpop.f32.mrf.mxu0
    %v721 = vadd.f32 %v708, %v720
    %v722 = vpop.f32.mrf.mxu0
    %723 = vdwg.mxu0
    %724 = vst [vmem:[%s9] sm:$0xff] %v721
    // Predicated region
    $region66: #{sac_noconv_forward.1} parent=1 // pred_check
      _
    $region67: #{sac_noconv_forward.1} parent=1 // pred_check_branch
      %726 = sbr.rel (0) target = $region69
    $region68: #{sac_noconv_forward.1} parent=1 // pred_region
      _
    $region69: #{sac_noconv_forward.1} parent=1 // pred_fallthru
      _
    // Predicated region
    $region70: #{sac_noconv_forward.1} parent=1 // pred_check
      _
    $region71: #{sac_noconv_forward.1} parent=1 // pred_check_branch
      %728 = sbr.rel (0) target = $region73
    $region72: #{sac_noconv_forward.1} parent=1 // pred_region
      %730 = vsyncadd [#allocation4], 0
      %s732 = sshll.u32 [#allocation14], 4
      %s733 = int_to_ptr.vmem [resolvable:$true] %s732
      %s734 = sshll.u32 %s10, 4
      %s735 = int_to_ptr.hbm [resolvable:$true] %s734
      %737 = dma.vmem_to_hbm [thread:$0]  %s733, 128, %s735, [#allocation4]
    $region73: #{sac_noconv_forward.1} parent=1 // pred_fallthru
      _
    // Predicated region
    $region74: #{sac_noconv_forward.1} parent=1 // pred_check
      _
    $region75: #{sac_noconv_forward.1} parent=1 // pred_check_branch
      %739 = sbr.rel (0) target = $region77
    $region76: #{sac_noconv_forward.1} parent=1 // pred_region
      _
    $region77: #{sac_noconv_forward.1} parent=1 // pred_fallthru
      _
    // Predicated region
    $region78: #{sac_noconv_forward.1} parent=1 // pred_check
      _
    $region79: #{sac_noconv_forward.1} parent=1 // pred_check_branch
      %741 = sbr.rel (0) target = $region81
    $region80: #{sac_noconv_forward.1} parent=1 // pred_region
      %743 = dma.done [#allocation4], 128
    $region81: #{sac_noconv_forward.1} parent=1 // pred_fallthru
      _
    %744 = vsyncpa [#allocation3], 1
    %745 = vsyncpa [#allocation6], 1
    %746 = vsyncpa [#allocation9], 1
    %747 = vsyncpa [#allocation12], 1
    %748 = vsyncpa [#allocation4], 1

</llo_original>
